<compile_context>
chip_gen: v5e
topology: v5e:2x2
jax: 0.10.0
libtpu: 0.0.40
codegen_flags: <defaults>
</compile_context>

<pallas_src>
import functools

import jax
import jax.numpy as jnp
from jax.experimental import pallas as pl
from jax.experimental.pallas import tpu as pltpu


def _round_up(x, m):
    return ((x + m - 1) // m) * m


def _nll_kernel(pred_ref, tgt_ref, rep_ref, wlane_ref, loss_ref, acc_ref,
                *, n_blocks, gate_dup, use_mxu):
    i = pl.program_id(1)                     # reduction axis ("arbitrary")
    n_inner = pl.num_programs(1)
    tm, L = pred_ref.shape

    @pl.when(i == 0)
    def _():
        acc_ref[...] = jnp.zeros_like(acc_ref)

    def compute_block():
        pred = pred_ref[...].astype(jnp.float32)               # (tm, L)
        lane = jax.lax.broadcasted_iota(jnp.int32, (1, L), 1).astype(jnp.float32)
        if use_mxu:
            # tgt_rep[m, l] = tgt[m, l // C], replicated on the idle MXU with a
            # constant 0/1 matrix; exact for class ids <= 256.
            tgt_rep = jnp.dot(tgt_ref[...], rep_ref[...],
                              preferred_element_type=jnp.float32)  # (tm, L)
        else:
            # g == 1: a single target column, broadcast over lanes (exact in f32).
            tgt_rep = tgt_ref[:, 0:1]                           # (tm, 1)
        # One compare per element; select (never multiply-by-0) so garbage /
        # -inf in unselected lanes can never inject NaN.
        contrib = jnp.where(tgt_rep == lane, pred, 0.0)
        # In-block reduction to one vreg row: pure VALU adds, no scratch traffic.
        acc_ref[...] += contrib.reshape(tm // 8, 8, L).sum(axis=0)

    if gate_dup:
        # Skip the clamped duplicate block of the last shard (never double count).
        blk = pl.program_id(0) * n_inner + i
        pl.when(blk < n_blocks)(compute_block)
    else:
        compute_block()

    @pl.when(i == n_inner - 1)
    def _():
        # Per-lane class weight applied once per shard (O(L), not O(N*C)),
        # then a single small cross-lane reduction.
        loss_ref[...] = (jnp.zeros_like(loss_ref)
                         - jnp.sum(acc_ref[...] * wlane_ref[...]))


def nll_loss_pallas(pred, target, weights=None, *, tile_rows=None, num_shards=1):
    """F.nll_loss(pred, target, weight=weights) with reduction='mean'.

    pred:   (N, C) log-probabilities (f32 or bf16; accumulation is f32).
    target: (N,)   integer class indices; entries outside [0, C) are ignored
                   (0 loss, 0 weight - PyTorch ignore_index-style semantics).
    """
    N, C = pred.shape
    tgt32 = target.astype(jnp.int32)
    valid = (tgt32 >= 0) & (tgt32 < C)

    # Lane-dense packing: largest g <= floor(128 / C) that divides N.
    g_cap = max(1, 128 // C) if C <= 128 else 1
    g = 1
    for cand in range(min(g_cap, N), 0, -1):
        if N % cand == 0:
            g = cand
            break
    L = g * C
    M = N // g
    pred_p = pred.reshape(M, L)                       # free contiguous reshape

    # Targets: sanitize ignored entries to L (never matches a lane), add the
    # per-sub-row lane offset r*C here, pass as exact f32.
    tgt_safe = jnp.where(valid, tgt32, L)
    offs = jnp.arange(g, dtype=jnp.int32) * C
    tgt_off = (tgt_safe.reshape(M, g) + offs[None, :]).astype(jnp.float32)

    # 0/1 replication matrix rep[r, l] = (l // C == r); contraction dim padded
    # to >= 8 columns (zero rows/cols change nothing).
    gk = max(g, 8)
    rep = (jnp.arange(gk)[:, None] ==
           (jnp.arange(L)[None, :] // C)).astype(jnp.float32)       # (gk, L)
    if gk > g:
        tgt_off = jnp.concatenate(
            [tgt_off, jnp.zeros((M, gk - g), jnp.float32)], axis=1)

    # Per-lane class weights (applied once per shard in-kernel) and the mean
    # denominator (computed here at O(N), never at O(N*C)).
    if weights is None:
        w_lane = jnp.ones((1, L), jnp.float32)
        w_sum = jnp.sum(valid.astype(jnp.float32))
    else:
        w = weights.astype(jnp.float32)
        w_lane = jnp.tile(w.reshape(1, C), (1, g))
        w_sum = jnp.sum(jnp.where(valid, w[jnp.clip(tgt32, 0, C - 1)], 0.0))

    # Row-tile sizing: ~2 MiB pred blocks amortize the ~0.35 us/step overhead
    # while double-buffered inputs stay far below every generation's scoped
    # VMEM default.
    padded_l = _round_up(L, 128)
    if tile_rows is None:
        tile_rows = min(4096, max(8, (2 << 20) // (padded_l * 4)))
        if num_shards > 1:
            # Keep >= ~4 inner blocks per shard so DMA overlaps compute (v7x).
            tile_rows = min(tile_rows,
                            max(8, _round_up(-(-M // (num_shards * 4)), 8)))
    tile_rows = max(8, (int(tile_rows) // 8) * 8)
    tile_rows = min(tile_rows, _round_up(M, 8))

    n_blocks = -(-M // tile_rows)
    n_shards = max(1, int(min(num_shards, n_blocks)))
    n_inner = -(-n_blocks // n_shards)
    gate_dup = (n_shards * n_inner) != n_blocks

    # Pad packed targets to whole blocks with a no-match sentinel so ragged /
    # duplicated pred-block garbage rows select nothing (no in-kernel row mask).
    m_full = n_blocks * tile_rows
    if m_full > M:
        tgt_off = jnp.concatenate(
            [tgt_off, jnp.full((m_full - M, gk), -1.0, jnp.float32)], axis=0)

    def row_map(sh, it):
        # Clamp so the (at most one) out-of-range block of the last shard never
        # issues an OOB DMA; its compute is skipped via pl.when.
        return (jnp.minimum(sh * n_inner + it, n_blocks - 1), 0)

    kernel = functools.partial(_nll_kernel, n_blocks=n_blocks,
                               gate_dup=gate_dup, use_mxu=(g > 1))

    loss_parts = pl.pallas_call(
        kernel,
        grid=(n_shards, n_inner),
        in_specs=[
            pl.BlockSpec((tile_rows, L), row_map),            # packed log-probs
            pl.BlockSpec((tile_rows, gk), row_map),           # packed target ids (f32)
            pl.BlockSpec((gk, L), lambda sh, it: (0, 0)),     # replication matrix
            pl.BlockSpec((1, L), lambda sh, it: (0, 0)),      # per-lane class weights
        ],
        out_specs=pl.BlockSpec((8, 128), lambda sh, it: (sh, 0)),
        out_shape=jax.ShapeDtypeStruct((n_shards * 8, 128), jnp.float32),
        scratch_shapes=[pltpu.VMEM((8, L), jnp.float32)],     # vreg-row accumulator
        compiler_params=pltpu.CompilerParams(
            dimension_semantics=("parallel", "arbitrary")),
    )(pred_p, tgt_off, rep, w_lane)

    # One scalar per shard (splatted across its (8, 128) block).
    loss_sum = jnp.sum(loss_parts[::8, 0])
    # Note: if every target is ignored, w_sum == 0 and this returns NaN,
    # matching PyTorch's behaviour.
    return loss_sum / w_sum


def get_loss_forward(pred, target, weights=None):
    """Mirror of curvenet_seg.get_loss.forward."""
    return nll_loss_pallas(pred, target, weights)


def _nll_loss_ref(pred, target, weights=None):
    N, C = pred.shape
    pred = pred.astype(jnp.float32)
    if weights is None:
        weights = jnp.ones((C,), jnp.float32)
    weights = weights.astype(jnp.float32)
    valid = (target >= 0) & (target < C)
    t = jnp.clip(target, 0, C - 1)
    picked = pred[jnp.arange(N), t]
    w = jnp.where(valid, weights[t], 0.0)
    return jnp.sum(-picked * w) / jnp.sum(w)


if __name__ == "__main__":
    key = jax.random.PRNGKey(0)
    k1, k2, k3, k4, k5 = jax.random.split(key, 5)

    # Case 1: lane-dense path (C=16 -> 8 rows packed per 128-lane vreg row).
    B, P, C = 2, 64, 16
    N = B * P
    pred = jax.nn.log_softmax(jax.random.normal(k1, (N, C), jnp.float32), axis=-1)
    target = jax.random.randint(k2, (N,), 0, C, jnp.int32)
    weights = jax.random.uniform(k3, (C,), jnp.float32, 0.5, 1.5)

    out_unw = jax.block_until_ready(get_loss_forward(pred, target))
    out_w = jax.block_until_ready(get_loss_forward(pred, target, weights))
    assert jnp.allclose(out_unw, _nll_loss_ref(pred, target), atol=1e-5, rtol=1e-5)
    assert jnp.allclose(out_w, _nll_loss_ref(pred, target, weights), atol=1e-5, rtol=1e-5)

    # Case 1b: bf16 log-probs (cast to f32 inside the kernel, f32 accumulation).
    pred_bf16 = pred.astype(jnp.bfloat16)
    out_bf16 = jax.block_until_ready(nll_loss_pallas(pred_bf16, target, weights))
    assert jnp.allclose(out_bf16, _nll_loss_ref(pred_bf16, target, weights),
                        atol=1e-2, rtol=1e-2)

    # Case 2: CurveNet part-seg class count (C=50 -> g=2, L=100), multi-block,
    # 2-way core sharding with an odd block count (gated duplicate block).
    C2, N2 = 50, 360
    pred2 = jax.nn.log_softmax(jax.random.normal(k4, (N2, C2), jnp.float32), axis=-1)
    target2 = jax.random.randint(k5, (N2,), 0, C2, jnp.int32)
    out2 = jax.block_until_ready(
        nll_loss_pallas(pred2, target2, tile_rows=72, num_shards=2))
    assert jnp.allclose(out2, _nll_loss_ref(pred2, target2), atol=1e-5, rtol=1e-5)

    # Case 3: non-divisor C (C=10 -> g=10, L=100) plus ignored targets
    # (PyTorch ignore_index=-100 semantics) and weights.
    C3, N3 = 10, 100
    pred3 = jax.nn.log_softmax(jax.random.normal(k1, (N3, C3), jnp.float32), axis=-1)
    target3 = jax.random.randint(k2, (N3,), 0, C3, jnp.int32)
    target3 = target3.at[::7].set(-100)
    weights3 = jax.random.uniform(k3, (C3,), jnp.float32, 0.5, 1.5)
    out3 = jax.block_until_ready(nll_loss_pallas(pred3, target3, weights3))
    assert jnp.allclose(out3, _nll_loss_ref(pred3, target3, weights3),
                        atol=1e-5, rtol=1e-5)

    print("KERNEL_OK")
</pallas_src>

<mosaic_0001>
module attributes {stable_mosaic.version = 11 : i64} {
  func.func @_nll_kernel(%arg0: i32, %arg1: i32, %arg2: memref<16x128xf32, #tpu.memory_space<vmem>>, %arg3: memref<16x8xf32, #tpu.memory_space<vmem>>, %arg4: memref<8x128xf32, #tpu.memory_space<vmem>>, %arg5: memref<1x128xf32, #tpu.memory_space<vmem>>, %arg6: memref<8x128xf32, #tpu.memory_space<vmem>>, %arg7: memref<8x128xf32, #tpu.memory_space<vmem>>) attributes {dimension_semantics = [#tpu.dimension_semantics<parallel>, #tpu.dimension_semantics<arbitrary>], iteration_bounds = array<i64: 1, 1>, scalar_prefetch = 0 : i64, scratch_operands = 1 : i64, tpu.core_type = #tpu.core_type<tc>, window_params = [{transform_indices = @transform_0, window_bounds = array<i64: 16, 128>}, {transform_indices = @transform_1, window_bounds = array<i64: 16, 8>}, {pipeline_mode = #tpu.pipeline_mode<synchronous>, transform_indices = @transform_2, window_bounds = array<i64: 8, 128>}, {pipeline_mode = #tpu.pipeline_mode<synchronous>, transform_indices = @transform_3, window_bounds = array<i64: 1, 128>}, {transform_indices = @transform_4, window_bounds = array<i64: 8, 128>}]} {
    %c0_i32 = arith.constant 0 : i32
    %0 = arith.cmpi eq, %arg1, %c0_i32 : i32
    %1 = arith.extui %0 : i1 to i32
    %c0_i32_0 = arith.constant 0 : i32
    %2 = arith.cmpi ne, %1, %c0_i32_0 : i32
    scf.if %2 {
      %cst_14 = arith.constant 0.000000e+00 : f32
      %21 = vector.broadcast %cst_14 : f32 to vector<8x128xf32>
      %c0_15 = arith.constant 0 : index
      %c0_16 = arith.constant 0 : index
      %22 = vector.load %arg7[%c0_15, %c0_16] : memref<8x128xf32, #tpu.memory_space<vmem>>, vector<8x128xf32>
      tpu.vector_store %arg7[%c0_15, %c0_16], %21 {strides = array<i32>} : memref<8x128xf32, #tpu.memory_space<vmem>>, vector<8x128xf32>,
    } else {
    }
    %c0 = arith.constant 0 : index
    %c0_1 = arith.constant 0 : index
    %3 = vector.load %arg2[%c0, %c0_1] : memref<16x128xf32, #tpu.memory_space<vmem>>, vector<16x128xf32>
    %4 = tpu.iota {dimensions = array<i32: 1>} : vector<1x128xi32>
    %5 = arith.sitofp %4 : vector<1x128xi32> to vector<1x128xf32>
    %c0_2 = arith.constant 0 : index
    %c0_3 = arith.constant 0 : index
    %6 = vector.load %arg3[%c0_2, %c0_3] : memref<16x8xf32, #tpu.memory_space<vmem>>, vector<16x8xf32>
    %c0_4 = arith.constant 0 : index
    %c0_5 = arith.constant 0 : index
    %7 = vector.load %arg4[%c0_4, %c0_5] : memref<8x128xf32, #tpu.memory_space<vmem>>, vector<8x128xf32>
    %cst = arith.constant dense<0.000000e+00> : vector<16x128xf32>
    %8 = tpu.matmul %6, %7, %cst {dimension_numbers = #tpu.dot_dimension_numbers<[1], [0], [0], [1], [0, 0, 1, 1], [], []>} : vector<16x8xf32>, vector<8x128xf32>, vector<16x128xf32> -> vector<16x128xf32>
    %9 = vector.broadcast %5 : vector<1x128xf32> to vector<16x128xf32>
    %10 = arith.cmpf oeq, %8, %9 : vector<16x128xf32>
    %cst_6 = arith.constant 0.000000e+00 : f32
    %11 = vector.broadcast %cst_6 : f32 to vector<16x128xf32>
    %12 = arith.select %10, %3, %11 : vector<16x128xi1>, vector<16x128xf32>
    %c0_7 = arith.constant 0 : index
    %c0_8 = arith.constant 0 : index
    %13 = vector.load %arg7[%c0_7, %c0_8] : memref<8x128xf32, #tpu.memory_space<vmem>>, vector<8x128xf32>
    %14 = vector.shape_cast %12 : vector<16x128xf32> to vector<2x8x128xf32>
    %cst_9 = arith.constant dense<0.000000e+00> : vector<8x128xf32>
    %15 = vector.multi_reduction <add>, %14, %cst_9 [0] : vector<2x8x128xf32> to vector<8x128xf32>
    %16 = arith.addf %13, %15 : vector<8x128xf32>
    %c0_10 = arith.constant 0 : index
    %c0_11 = arith.constant 0 : index
    %17 = vector.load %arg7[%c0_10, %c0_11] : memref<8x128xf32, #tpu.memory_space<vmem>>, vector<8x128xf32>
    tpu.vector_store %arg7[%c0_10, %c0_11], %16 {strides = array<i32>} : memref<8x128xf32, #tpu.memory_space<vmem>>, vector<8x128xf32>,
    %c0_i32_12 = arith.constant 0 : i32
    %18 = arith.cmpi eq, %arg1, %c0_i32_12 : i32
    %19 = arith.extui %18 : i1 to i32
    %c0_i32_13 = arith.constant 0 : i32
    %20 = arith.cmpi ne, %19, %c0_i32_13 : i32
    scf.if %20 {
      %cst_14 = arith.constant 0.000000e+00 : f32
      %21 = vector.broadcast %cst_14 : f32 to vector<8x128xf32>
      %c0_15 = arith.constant 0 : index
      %c0_16 = arith.constant 0 : index
      %22 = vector.load %arg7[%c0_15, %c0_16] : memref<8x128xf32, #tpu.memory_space<vmem>>, vector<8x128xf32>
      %c0_17 = arith.constant 0 : index
      %c0_18 = arith.constant 0 : index
      %23 = vector.load %arg5[%c0_17, %c0_18] : memref<1x128xf32, #tpu.memory_space<vmem>>, vector<1x128xf32>
      %24 = vector.broadcast %23 : vector<1x128xf32> to vector<8x128xf32>
      %25 = arith.mulf %22, %24 : vector<8x128xf32>
      %26 = vector.shape_cast %25 : vector<8x128xf32> to vector<1x8x128xf32>
      %cst_19 = arith.constant dense<0.000000e+00> : vector<1xf32>
      %27 = vector.multi_reduction <add>, %26, %cst_19 [1, 2] : vector<1x8x128xf32> to vector<1xf32>
      %28 = vector.shape_cast %27 : vector<1xf32> to vector<1x1x1xf32>
      %29 = vector.extract %28[0, 0, 0] : f32 from vector<1x1x1xf32>
      %30 = vector.broadcast %29 : f32 to vector<8x128xf32>
      %31 = arith.subf %21, %30 : vector<8x128xf32>
      %c0_20 = arith.constant 0 : index
      %c0_21 = arith.constant 0 : index
      %32 = vector.load %arg6[%c0_20, %c0_21] : memref<8x128xf32, #tpu.memory_space<vmem>>, vector<8x128xf32>
      tpu.vector_store %arg6[%c0_20, %c0_21], %31 {strides = array<i32>} : memref<8x128xf32, #tpu.memory_space<vmem>>, vector<8x128xf32>,
    } else {
    }
    return
  }
  func.func @transform_0(%arg0: i32, %arg1: i32) -> (i32, i32) {
    %c1_i32 = arith.constant 1 : i32
    %0 = arith.muli %arg0, %c1_i32 : i32
    %1 = arith.addi %0, %arg1 : i32
    %c0_i32 = arith.constant 0 : i32
    %2 = arith.minsi %1, %c0_i32 : i32
    %c0_i32_0 = arith.constant 0 : i32
    %c0_i32_1 = arith.constant 0 : i32
    return %2, %c0_i32_0 : i32, i32
  }
  func.func @transform_1(%arg0: i32, %arg1: i32) -> (i32, i32) {
    %c1_i32 = arith.constant 1 : i32
    %0 = arith.muli %arg0, %c1_i32 : i32
    %1 = arith.addi %0, %arg1 : i32
    %c0_i32 = arith.constant 0 : i32
    %2 = arith.minsi %1, %c0_i32 : i32
    %c0_i32_0 = arith.constant 0 : i32
    %c0_i32_1 = arith.constant 0 : i32
    return %2, %c0_i32_0 : i32, i32
  }
  func.func @transform_2(%arg0: i32, %arg1: i32) -> (i32, i32) {
    %c0_i32 = arith.constant 0 : i32
    %c0_i32_0 = arith.constant 0 : i32
    %c0_i32_1 = arith.constant 0 : i32
    return %c0_i32, %c0_i32_0 : i32, i32
  }
  func.func @transform_3(%arg0: i32, %arg1: i32) -> (i32, i32) {
    %c0_i32 = arith.constant 0 : i32
    %c0_i32_0 = arith.constant 0 : i32
    %c0_i32_1 = arith.constant 0 : i32
    return %c0_i32, %c0_i32_0 : i32, i32
  }
  func.func @transform_4(%arg0: i32, %arg1: i32) -> (i32, i32) {
    %c0_i32 = arith.constant 0 : i32
    %c0_i32_0 = arith.constant 0 : i32
    return %arg0, %c0_i32 : i32, i32
  }
}

</mosaic_0001>

<llo_original>
// kernel: tpu_custom_call.1
$region0: #{tpu_custom_call.1}
  #allocation0 [shape = 'u32[]', space=smem, size = 0x4, offset = 0x4, fixed_abs, tag = 'smem constant byte address 0x4 - core index']
  #allocation1 [shape = 'u32[72,128]{1,0:T(1,128)}', space=vmem, size = 0x9000, scoped, tag = 'internal scratch']
  #allocation2 [shape = 'f32[8,128]{1,0:T(8,128)}', space=vmem, size = 0x1000, scoped, tag = 'scratch operand']
  %s0 = inlined_call_operand.vmem [shape: f32[16,128], index: 0, kind: input, shape index: {}]
  %s1 = inlined_call_operand.vmem [shape: f32[16,8], index: 1, kind: input, shape index: {}]
  %s2 = inlined_call_operand.vmem [shape: f32[8,128], index: 2, kind: input, shape index: {}]
  %s3 = inlined_call_operand.vmem [shape: f32[1,128], index: 3, kind: input, shape index: {}]
  %s4 = inlined_call_operand.hbm [shape: f32[8,128], index: 4, kind: output, shape index: {}]
  %s5 = sld [smem:[#allocation0]]
  $region34: #{tpu_custom_call.1} parent=0
    _
  %s7 = ssub.s32 1, %s5
  %s8 = scalar_select 0, %s7, %s5
  $region1: #{tpu_custom_call.1} parent=0
    #allocation3 [shape = 'u8[4096]{0}', space=vmem, size = 0x1000, scoped, tag = 'output window, operand 0, single buffered']
    #allocation4 [shape = 's32[1]{0}', space=sflag, size = 0x4, scoped, tag = 'scoped memory for tpu_custom_call.1']
    %9 = vsyncpa [#allocation4], 0
    // Predicated region
    $region2: #{tpu_custom_call.1} parent=1 // pred_check
      _
    $region3: #{tpu_custom_call.1} parent=1 // pred_check_branch
      %11 = sbr.rel (0) target = $region5
    $region4: #{tpu_custom_call.1} parent=1 // pred_region
      %s12 = sadd.s32 0, 0
      %p13 = scmp.lt.s32.totalorder %s12, 0
      %s14 = scalar_select %p13, %s12, 0
      %s15 = smul.u32 2, %s14
      %p16 = scmp.lt.s32.totalorder %s15, 1
      %s17 = scalar_select %p16, %s15, 1
      %s18 = smul.addr %s17, 8
      %s19 = scalar_lea.vmem %s0, %s18
      %s20 = sadd.s32 0, 0
      %p21 = scmp.lt.s32.totalorder %s20, 0
      %s22 = scalar_select %p21, %s20, 0
      %s23 = smul.u32 2, %s22
    $region5: #{tpu_custom_call.1} parent=1 // pred_fallthru
      _
    // Predicated region
    $region6: #{tpu_custom_call.1} parent=1 // pred_check
      _
    $region7: #{tpu_custom_call.1} parent=1 // pred_check_branch
      %25 = sbr.rel (0) target = $region9
    $region8: #{tpu_custom_call.1} parent=1 // pred_region
      %s26 = sadd.s32 0, 0
      %p27 = scmp.lt.s32.totalorder %s26, 0
      %s28 = scalar_select %p27, %s26, 0
      %s29 = smul.u32 2, %s28
      %p30 = scmp.lt.s32.totalorder %s29, 1
      %s31 = scalar_select %p30, %s29, 1
      %s32 = smul.addr %s31, 8
      %s33 = scalar_lea.vmem %s1, %s32
      %s34 = sadd.s32 0, 0
      %p35 = scmp.lt.s32.totalorder %s34, 0
      %s36 = scalar_select %p35, %s34, 0
      %s37 = smul.u32 2, %s36
    $region9: #{tpu_custom_call.1} parent=1 // pred_fallthru
      _
    // Predicated region
    $region10: #{tpu_custom_call.1} parent=1 // pred_check
      _
    $region11: #{tpu_custom_call.1} parent=1 // pred_check_branch
      %39 = sbr.rel (0) target = $region13
    $region12: #{tpu_custom_call.1} parent=1 // pred_region
      _
    $region13: #{tpu_custom_call.1} parent=1 // pred_fallthru
      _
    // Predicated region
    $region14: #{tpu_custom_call.1} parent=1 // pred_check
      _
    $region15: #{tpu_custom_call.1} parent=1 // pred_check_branch
      %41 = sbr.rel (0) target = $region17
    $region16: #{tpu_custom_call.1} parent=1 // pred_region
      _
    $region17: #{tpu_custom_call.1} parent=1 // pred_fallthru
      _
    %s42 = sadd.s32 0, 0
    %p43 = scmp.lt.s32.totalorder %s42, 0
    %s44 = scalar_select %p43, %s42, 0
    %s45 = smul.u32 2, %s44
    %p46 = scmp.lt.s32.totalorder %s45, 1
    %s47 = scalar_select %p46, %s45, 1
    %s48 = smul.addr %s47, 8
    %s49 = scalar_lea.vmem %s0, %s48
    %s50 = sadd.s32 0, 0
    %p51 = scmp.lt.s32.totalorder %s50, 0
    %s52 = scalar_select %p51, %s50, 0
    %s53 = smul.u32 2, %s52
    %p54 = scmp.lt.s32.totalorder %s53, 1
    %s55 = scalar_select %p54, %s53, 1
    %s56 = smul.addr %s55, 8
    %s57 = scalar_lea.vmem %s1, %s56
    %s58 = sadd.s32 0, 0
    %p59 = scmp.lt.s32.totalorder %s58, 0
    %s60 = scalar_select %p59, %s58, 0
    %s61 = smul.u32 2, %s60
    %p62 = scmp.lt.s32.totalorder %s61, 1
    %s63 = scalar_select %p62, %s61, 1
    %s64 = smul.addr %s63, 8
    %s65 = scalar_lea.vmem %s0, %s64
    %s66 = sadd.s32 0, 0
    %p67 = scmp.lt.s32.totalorder %s66, 0
    %s68 = scalar_select %p67, %s66, 0
    %s69 = smul.u32 2, %s68
    %s70 = sadd.s32 0, 0
    %p71 = scmp.lt.s32.totalorder %s70, 0
    %s72 = scalar_select %p71, %s70, 0
    %s73 = smul.u32 2, %s72
    %p74 = scmp.lt.s32.totalorder %s73, 1
    %s75 = scalar_select %p74, %s73, 1
    %s76 = smul.addr %s75, 8
    %s77 = scalar_lea.vmem %s1, %s76
    %s78 = sadd.s32 0, 0
    %p79 = scmp.lt.s32.totalorder %s78, 0
    %s80 = scalar_select %p79, %s78, 0
    %s81 = smul.u32 2, %s80
    %p82 = scmp.eq.s32.totalorder 0, 0
    // Predicated region
    $region18: #{tpu_custom_call.1} parent=1 // pred_check
      %p83 = pneg %p82
    $region19: #{tpu_custom_call.1} parent=1 // pred_check_branch
      %85 = sbr.rel (%p83) target = $region21
    $region20: #{tpu_custom_call.1} parent=1 // pred_region
      %86 = vst [vmem:[#allocation2] sm:$0xff] 0.0
    $region21: #{tpu_custom_call.1} parent=1 // pred_fallthru
      _
    %v87 = vld [vmem:[%s65] sm:$0xff]
    %v88 = vld [vmem:[%s65 + $0x8] sm:$0xff]
    %v89 = vlaneseq
    %v90 = vand.u32 %v89, 127
    %v91 = vcvt.s32.f32 %v90
    %v92 = vld [vmem:[%s77] sm:$0xff]
    %v93 = vld [vmem:[%s77 + $0x8] sm:$0xff]
    %v94 = vld [vmem:[%s2] sm:$0xff]
    %vm95 = vcmask 64512
    %v97 = vsel %vm95, %v92, 0
    %v100 = vsel %vm95, %v93, 0
    %102 = vmatpush.msra.mxu0 0.0
    %103 = vmatpush.msra.mxu0 0.0
    %104 = vmatpush.msra.mxu0 0.0
    %105 = vmatpush.msra.mxu0 0.0
    %106 = vmatpush.msra.mxu0 0.0
    %107 = vmatpush.msra.mxu0 0.0
    %108 = vmatpush.msra.mxu0 0.0
    %109 = vmatpush.msra.mxu0 0.0
    %110 = vmatpush.msra.mxu0 0.0
    %111 = vmatpush.msra.mxu0 0.0
    %112 = vmatpush.msra.mxu0 0.0
    %113 = vmatpush.msra.mxu0 0.0
    %114 = vmatpush.msra.mxu0 0.0
    %115 = vmatpush.msra.mxu0 0.0
    %116 = vmatpush.msra.mxu0 0.0
    %117 = vmatpush.msra.mxu0 %v94
    %118 = vmatmul.f32.gmra.mxu0 %v97
    %v119 = vpop.f32.mrf.mxu0
    %v120 = vadd.f32 0.0, %v119
    %121 = vmatmul.f32.gmra.mxu0 %v100
    %v122 = vpop.f32.mrf.mxu0
    %v123 = vadd.f32 0.0, %v122
    %124 = vdwg.mxu0
    %vm125 = vcmp.eq.f32.partialorder %v120, %v91
    %vm126 = vcmp.eq.f32.partialorder %v123, %v91
    %v127 = vsel %vm125, %v87, 0.0
    %v128 = vsel %vm126, %v88, 0.0
    %v129 = vld [vmem:[#allocation2] sm:$0xff]
    %v130 = vadd.f32 %v127, %v128
    %v131 = vadd.f32 %v129, %v130
    %132 = vst [vmem:[#allocation2] sm:$0xff] %v131
    // Predicated region
    $region22: #{tpu_custom_call.1} parent=1 // pred_check
      %p133 = pneg %p82
    $region23: #{tpu_custom_call.1} parent=1 // pred_check_branch
      %135 = sbr.rel (%p133) target = $region25
    $region24: #{tpu_custom_call.1} parent=1 // pred_region
      %v136 = vld [vmem:[#allocation2] sm:$0xff]
      %v137 = vld [vmem:[%s3] sm:$0x1]
      %v139 = vperm.slane %v137, 0
      %v141 = vmul.f32 %v136, %v139
      %142 = vadd.xlane.f32.xlu0 %v141
      %v143 = vpop.xlane.xlu0 %142
      %v144 = vrot.slane %v143, 4
      %v145 = vadd.f32 %v143, %v144
      %v146 = vrot.slane %v145, 2
      %v147 = vadd.f32 %v145, %v146
      %v148 = vrot.slane %v147, 1
      %v149 = vadd.f32 %v147, %v148
      %s150 = vtos %v149
      %v151 = vstv %s150
      %v152 = vsub.f32 0.0, %v151
      %153 = vst [vmem:[#allocation3] sm:$0xff] %v152
    $region25: #{tpu_custom_call.1} parent=1 // pred_fallthru
      _
    // Predicated region
    $region26: #{tpu_custom_call.1} parent=1 // pred_check
      _
    $region27: #{tpu_custom_call.1} parent=1 // pred_check_branch
      %155 = sbr.rel (0) target = $region29
    $region28: #{tpu_custom_call.1} parent=1 // pred_region
      %157 = vsyncadd [#allocation4], 0
      %s159 = sshll.u32 [#allocation3], 4
      %s160 = int_to_ptr.vmem [resolvable:$true] %s159
      %s161 = sshll.u32 %s4, 4
      %s162 = int_to_ptr.hbm [resolvable:$true] %s161
      %164 = dma.vmem_to_hbm [thread:$0]  %s160, 128, %s162, [#allocation4]
    $region29: #{tpu_custom_call.1} parent=1 // pred_fallthru
      _
    // Predicated region
    $region30: #{tpu_custom_call.1} parent=1 // pred_check
      _
    $region31: #{tpu_custom_call.1} parent=1 // pred_check_branch
      %166 = sbr.rel (0) target = $region33
    $region32: #{tpu_custom_call.1} parent=1 // pred_region
      %168 = dma.done [#allocation4], 128
    $region33: #{tpu_custom_call.1} parent=1 // pred_fallthru
      _
    %169 = vsyncpa [#allocation4], 1

</llo_original>
